<compile_context>
chip_gen: v6e
topology: v6e:2x2x1
jax: 0.10.0
libtpu: 0.0.40
codegen_flags: <defaults>
</compile_context>

<pallas_src>
import numpy as np
import jax
import jax.numpy as jnp
from jax import lax
from jax.experimental import pallas as pl
from jax.experimental.pallas import tpu as pltpu


# ---------------------------------------------------------------------------
# Host-side (numpy) traversal bookkeeping -- mirrors the torch pipe exactly.
# ---------------------------------------------------------------------------
def _get_bools(flatten_method, reverse=False):
    if reverse:
        corner_map = {'tl': 0, 'tr': 1, 'br': 2, 'bl': 3}
    else:
        corner_map = {'tl': 0, 'tr': 3, 'br': 2, 'bl': 1}
    start_corner = corner_map[flatten_method[:2]]
    rotations = int(flatten_method[2])
    assert rotations in (0, 1), 'Rotation must be either 0 or 1'
    row_prim = rotations == 0
    permute_HW = (int(row_prim) + start_corner % 2) == 0
    is_snake = flatten_method[3:] == 'snake'
    return start_corner, permute_HW, is_snake


def _skip_flip_np(x, start=1, step=2):
    # SkipFlip(start=1, step=2, dims=[-2]): every `step`-th slice along axis -3
    # (starting at `start`) is reversed along axis -2 (snake traversal).
    H = x.shape[-3]
    sel = list(range(start, H, step))
    out = np.array(x)
    out[..., sel, :, :] = np.flip(x[..., sel, :, :], axis=-2)
    return out


def _apply_traversal_ops_np(x, method):
    start_corner, permute_HW, is_snake = _get_bools(method)
    x = np.rot90(x, k=start_corner, axes=(-2, -3))      # torch.rot90(dims=[-2,-3])
    if permute_HW:
        x = np.swapaxes(x, -3, -2)                      # '... H W C -> ... W H C'
    if is_snake:
        x = _skip_flip_np(x, start=1, step=2)
    return x


def _apply_pipe_np(x, method, patch_size):
    """Apply one flatten_pipe to a (..., H, W, C) numpy array."""
    if isinstance(method, tuple):
        hp, wp = patch_size
        lead = x.shape[:-3]
        HH, WW, C = x.shape[-3:]
        Hp, Wp = HH // hp, WW // wp
        x = x.reshape(lead + (Hp, hp, Wp, wp, C))
        x = np.moveaxis(x, -4, -3)                      # ... Hp Wp hp wp c
        x = _apply_traversal_ops_np(x, method[0])       # acts on (hp, wp)
        nd = x.ndim
        x = np.transpose(x, tuple(range(nd - 5)) + (nd - 3, nd - 2, nd - 5, nd - 4, nd - 1))
        x = _apply_traversal_ops_np(x, method[1])       # acts on (Hp, Wp)
        nd = x.ndim
        x = np.transpose(x, tuple(range(nd - 5)) + (nd - 3, nd - 5, nd - 2, nd - 4, nd - 1))
        s = x.shape
        return x.reshape(s[:-5] + (s[-5] * s[-4], s[-3] * s[-2], s[-1]))
    return _apply_traversal_ops_np(x, method)


# ---------------------------------------------------------------------------
# Run decomposition: express the permutation as per-run block reads.
# ---------------------------------------------------------------------------
def _analyze_runs(oriented_idx, L):
    """If the permutation, chunked into runs of length L, reads aligned
    contiguous length-L blocks of the oriented source (each forward or
    backward), return (row_map, flip); otherwise None."""
    N = oriented_idx.shape[0]
    if L < 1 or N % L != 0:
        return None
    g = oriented_idx.reshape(N // L, L)
    ramp = np.arange(L, dtype=oriented_idx.dtype)
    fwd = np.all(g == g[:, :1] + ramp, axis=1) & (g[:, 0] % L == 0)
    bwd = np.all(g == g[:, :1] - ramp, axis=1) & (g[:, -1] % L == 0)
    if not np.all(fwd | bwd):
        return None
    base = np.where(fwd, g[:, 0], g[:, -1])
    row_map = (base // L).astype(np.int32)
    flip = np.where(fwd, 0, 1).astype(np.int32)
    return row_map, flip


def _orientation_candidates(HH, WW, C, method, patch_size):
    """Candidate run decompositions, largest run length first.  Each entry:
    (L, convert(flat_idx) -> oriented flat idx, view(x4) -> (B, R, L, C))."""
    cands = []

    # whole grid rows (runs = rows of x)
    cands.append((WW, lambda f: f, lambda x4: x4))

    # whole grid columns (runs = rows of the H/W-transposed x)
    cands.append((HH,
                  lambda f: (f % WW) * HH + f // WW,
                  lambda x4: jnp.swapaxes(x4, 1, 2)))

    if isinstance(method, tuple):
        hp, wp = patch_size
        Hp, Wp = HH // hp, WW // wp

        # within-patch rows (aligned wp-wide segments of the flattened grid)
        cands.append((wp, lambda f: f,
                      lambda x4: x4.reshape(x4.shape[0], HH * Wp, wp, C)))

        # within-patch columns
        def _pcol_conv(f):
            h, w = f // WW, f % WW
            Hi, h2 = h // hp, h % hp
            Wi, w2 = w // wp, w % wp
            return ((Hi * Wp + Wi) * wp + w2) * hp + h2

        def _pcol_view(x4):
            B = x4.shape[0]
            y = x4.reshape(B, Hp, hp, Wp, wp, C)
            y = jnp.transpose(y, (0, 1, 3, 4, 2, 5))
            return y.reshape(B, Hp * Wp * wp, hp, C)

        cands.append((hp, _pcol_conv, _pcol_view))

    # last resort: per-element gather (always valid, slow; should not trigger
    # for the supported method grammar).
    cands.append((1, lambda f: f,
                  lambda x4: x4.reshape(x4.shape[0], HH * WW, 1, C)))
    return cands


# ---------------------------------------------------------------------------
# Pallas kernels: BlockSpec-driven run gather.
# ---------------------------------------------------------------------------
def _copy_gather_kernel(rows_ref, src_ref, out_ref):
    # The gather itself is expressed in the input BlockSpec (rows_ref drives the
    # source block index); the body is a plain pipelined tile copy.
    out_ref[...] = src_ref[...]


def _flip_gather_kernel(rows_ref, flip_ref, src_ref, out_ref):
    r = pl.program_id(1)
    blk = src_ref[0]                                   # (L, C)

    @pl.when(flip_ref[r] == 0)
    def _():
        out_ref[0] = blk

    @pl.when(flip_ref[r] != 0)
    def _():
        # Reverse the run along L with an anti-diagonal 0/1 permutation matmul
        # on the MXU (exact for finite float inputs; avoids lax.rev lowering).
        L = blk.shape[0]
        i = lax.broadcasted_iota(jnp.int32, (L, L), 0)
        j = lax.broadcasted_iota(jnp.int32, (L, L), 1)
        rev = (i + j == L - 1).astype(blk.dtype)
        out_ref[0] = jnp.dot(rev, blk,
                             preferred_element_type=jnp.float32).astype(out_ref.dtype)


def _gather_runs(src, row_map, flip):
    """out[b, k] = src[b, row_map[k]]  (reversed along axis -2 where flip[k])."""
    B, R, P, Q = src.shape
    K = int(row_map.shape[0])
    itemsize = jnp.dtype(src.dtype).itemsize
    bytes_moved = 2 * B * K * P * Q * itemsize
    out_shape = jax.ShapeDtypeStruct((B, K, P, Q), src.dtype)
    rows = jnp.asarray(row_map, dtype=jnp.int32)
    any_flip = bool(np.any(flip))

    if not any_flip:
        grid_spec = pltpu.PrefetchScalarGridSpec(
            num_scalar_prefetch=1,
            grid=(B, K),
            in_specs=[pl.BlockSpec((None, 1, P, Q),
                                   lambda b, k, rm: (b, rm[k], 0, 0))],
            out_specs=pl.BlockSpec((None, 1, P, Q),
                                   lambda b, k, rm: (b, k, 0, 0)),
        )
        return pl.pallas_call(
            _copy_gather_kernel,
            out_shape=out_shape,
            grid_spec=grid_spec,
            compiler_params=pltpu.CompilerParams(
                dimension_semantics=("parallel", "parallel")),
            cost_estimate=pl.CostEstimate(flops=0, transcendentals=0,
                                          bytes_accessed=bytes_moved),
        )(rows, src)

    flips = jnp.asarray(flip, dtype=jnp.int32)
    grid_spec = pltpu.PrefetchScalarGridSpec(
        num_scalar_prefetch=2,
        grid=(B, K),
        in_specs=[pl.BlockSpec((None, 1, P, Q),
                               lambda b, k, rm, fl: (b, rm[k], 0, 0))],
        out_specs=pl.BlockSpec((None, 1, P, Q),
                               lambda b, k, rm, fl: (b, k, 0, 0)),
    )
    return pl.pallas_call(
        _flip_gather_kernel,
        out_shape=out_shape,
        grid_spec=grid_spec,
        compiler_params=pltpu.CompilerParams(
            dimension_semantics=("parallel", "parallel")),
        cost_estimate=pl.CostEstimate(flops=2 * B * K * P * P * Q,
                                      transcendentals=0,
                                      bytes_accessed=bytes_moved),
    )(rows, flips, src)


def _permute_flatten(x4, flat_idx, method, patch_size):
    """x4: (B, HH, WW, C).  Returns (B, HH*WW, C) with spatial rows permuted by
    flat_idx, computed with the Pallas run-block gather."""
    B, HH, WW, C = x4.shape

    row_map = flip = src = None
    L = 1
    for L, conv, view_fn in _orientation_candidates(HH, WW, C, method, patch_size):
        res = _analyze_runs(conv(flat_idx), L)
        if res is not None:
            row_map, flip = res
            src = view_fn(x4)                              # (B, R, L, C)
            break

    any_flip = bool(np.any(flip))
    if not any_flip:
        if (L * C) % 128 == 0:
            # Lane-dense tiles: every store is a full, unmasked 128-lane row
            # even when C < 128.
            src = src.reshape(B, src.shape[1], (L * C) // 128, 128)
        out = _gather_runs(src, row_map, flip)
    elif jnp.issubdtype(x4.dtype, jnp.floating):
        out = _gather_runs(src, row_map, flip)
    else:
        # TODO(synk): non-float dtypes with snake runs: the in-kernel reversal
        # uses an MXU 0/1 matmul (float only), so reverse those runs in XLA.
        out = _gather_runs(src, row_map, np.zeros_like(flip))
        mask = jnp.asarray(flip.astype(bool))[None, :, None, None]
        out = jnp.where(mask, jnp.flip(out, axis=-2), out)

    return out.reshape(B, HH * WW, C)


# ---------------------------------------------------------------------------
# Traverse2D.forward equivalent
# ---------------------------------------------------------------------------
def traverse2d_forward(seq, flatten_methods, patch_size=(4, 4)):
    """Returns (output_seqs, output_indices, output_sizes) as the torch module.

    seq: a single (..., H, W, C) array (replicated per method) or a list of them.
    """
    if not isinstance(seq, (list, tuple)):
        seq = [seq for _ in flatten_methods]
    assert len(seq) == len(flatten_methods)
    first_shape = seq[0].shape
    assert all(s.shape == first_shape for s in seq)

    HH, WW = first_shape[-3], first_shape[-2]
    N = HH * WW
    idx_grid = (np.arange(HH, dtype=np.int64)[:, None] * WW
                + np.arange(WW, dtype=np.int64)[None, :])[..., None]   # (HH, WW, 1)

    output_seqs, output_indices, output_sizes = [], [], []
    for x, method in zip(seq, flatten_methods):
        perm_grid = _apply_pipe_np(idx_grid, method, patch_size)
        H_out, W_out = perm_grid.shape[-3], perm_grid.shape[-2]
        flat_idx = np.ascontiguousarray(perm_grid.reshape(-1))

        # inverse permutation bookkeeping (same semantics as the torch module)
        unflatten = np.empty(N, dtype=np.int32)
        unflatten[flat_idx] = np.arange(N, dtype=np.int32)

        lead = x.shape[:-3]
        C = x.shape[-1]
        B = int(np.prod(lead)) if lead else 1
        x4 = x.reshape((B, HH, WW, C))

        out = _permute_flatten(x4, flat_idx, method, patch_size)       # Pallas hot path
        output_seqs.append(out.reshape(lead + (N, C)))
        output_indices.append(jnp.asarray(unflatten))
        output_sizes.append((int(H_out), int(W_out)))
    return output_seqs, output_indices, output_sizes


# ---------------------------------------------------------------------------
# Demo / self-check
# ---------------------------------------------------------------------------
if __name__ == "__main__":
    key = jax.random.PRNGKey(0)
    Bb, Hh, Ww, Cc = 2, 16, 16, 32
    x = jax.random.normal(key, (Bb, Hh, Ww, Cc), dtype=jnp.float32)

    # Covers: copy/row (tl0), flip/row (br0snake), copy/col (tl1),
    # patched within-patch-row (tuple method).
    flatten_methods = ['tl0', 'br0snake', 'tl1', ('tl0', 'tr1snake')]
    patch_size = (4, 4)

    seqs, indices, sizes = traverse2d_forward(x, flatten_methods, patch_size)
    seqs = [jax.block_until_ready(s) for s in seqs]
    indices = [jax.block_until_ready(i) for i in indices]

    # Self-check against the direct (host) application of the traversal pipes.
    x_np = np.asarray(x)
    N = Hh * Ww
    idx_grid = (np.arange(Hh, dtype=np.int64)[:, None] * Ww
                + np.arange(Ww, dtype=np.int64)[None, :])[..., None]
    for s, inv_idx, (Ho, Wo), method in zip(seqs, indices, sizes, flatten_methods):
        ref = _apply_pipe_np(x_np, method, patch_size).reshape(Bb, N, Cc)
        np.testing.assert_array_equal(np.asarray(s), ref)
        flat_idx = _apply_pipe_np(idx_grid, method, patch_size).reshape(-1)
        assert Ho * Wo == N
        assert np.array_equal(np.asarray(inv_idx)[flat_idx], np.arange(N))

    print("KERNEL_OK")
</pallas_src>

<mosaic_0001>
module attributes {stable_mosaic.version = 11 : i64} {
  func.func @_copy_gather_kernel(%arg0: i32, %arg1: i32, %arg2: memref<16xi32, #tpu.memory_space<smem>>, %arg3: memref<1x1x4x128xf32, #tpu.memory_space<vmem>>, %arg4: memref<1x1x4x128xf32, #tpu.memory_space<vmem>>) attributes {dimension_semantics = [#tpu.dimension_semantics<parallel>, #tpu.dimension_semantics<parallel>], iteration_bounds = array<i64: 2, 16>, scalar_prefetch = 1 : i64, scratch_operands = 0 : i64, tpu.core_type = #tpu.core_type<tc>, window_params = [{transform_indices = @transform_0, window_bounds = array<i64: 1, 1, 4, 128>}, {transform_indices = @transform_1, window_bounds = array<i64: 1, 1, 4, 128>}]} {
    %c0 = arith.constant 0 : index
    %c0_0 = arith.constant 0 : index
    %c0_1 = arith.constant 0 : index
    %c0_2 = arith.constant 0 : index
    %0 = vector.load %arg3[%c0, %c0_0, %c0_1, %c0_2] : memref<1x1x4x128xf32, #tpu.memory_space<vmem>>, vector<1x1x4x128xf32>
    %1 = vector.shape_cast %0 : vector<1x1x4x128xf32> to vector<1x4x128xf32>
    %c0_3 = arith.constant 0 : index
    %c0_4 = arith.constant 0 : index
    %c0_5 = arith.constant 0 : index
    %c0_6 = arith.constant 0 : index
    %2 = vector.load %arg4[%c0_3, %c0_4, %c0_5, %c0_6] : memref<1x1x4x128xf32, #tpu.memory_space<vmem>>, vector<1x1x4x128xf32>
    %3 = vector.shape_cast %2 : vector<1x1x4x128xf32> to vector<1x4x128xf32>
    %4 = vector.shape_cast %1 : vector<1x4x128xf32> to vector<1x1x4x128xf32>
    tpu.vector_store %arg4[%c0_3, %c0_4, %c0_5, %c0_6], %4 {strides = array<i32>} : memref<1x1x4x128xf32, #tpu.memory_space<vmem>>, vector<1x1x4x128xf32>,
    return
  }
  func.func @transform_0(%arg0: i32, %arg1: i32, %arg2: memref<16xi32, #tpu.memory_space<smem>>) -> (i32, i32, i32, i32) {
    %0 = arith.index_cast %arg1 : i32 to index
    %1 = memref.load %arg2[%0] : memref<16xi32, #tpu.memory_space<smem>>
    %c0_i32 = arith.constant 0 : i32
    %c0_i32_0 = arith.constant 0 : i32
    %c0_i32_1 = arith.constant 0 : i32
    return %arg0, %1, %c0_i32, %c0_i32_0 : i32, i32, i32, i32
  }
  func.func @transform_1(%arg0: i32, %arg1: i32, %arg2: memref<16xi32, #tpu.memory_space<smem>>) -> (i32, i32, i32, i32) {
    %c0_i32 = arith.constant 0 : i32
    %c0_i32_0 = arith.constant 0 : i32
    %c0_i32_1 = arith.constant 0 : i32
    return %arg0, %arg1, %c0_i32, %c0_i32_0 : i32, i32, i32, i32
  }
}

</mosaic_0001>

<llo_original>
// kernel: tpu_custom_call.1
$region0: #{tpu_custom_call.1}
  #allocation0 [shape = 'u32[]', space=smem, size = 0x4, offset = 0x4, fixed_abs, tag = 'smem constant byte address 0x4 - core index']
  #allocation1 [shape = 'u32[144,128]{1,0:T(1,128)}', space=vmem, size = 0x12000, scoped, tag = 'internal scratch']
  #allocation2 [shape = 's32[1]{0}', space=sflag, size = 0x4, scoped, tag = 'scoped memory for tpu_custom_call.1']
  #allocation3 [shape = 'u8[512]{0}', space=smem, size = 0x200, scoped, tag = 'prefetched SMEM operand 0']
  %s0 = inlined_call_operand.hbm [shape: s32[16], index: 0, kind: input, shape index: {}]
  %s1 = inlined_call_operand.hbm [shape: f32[2,16,4,128], index: 1, kind: input, shape index: {}]
  %s2 = inlined_call_operand.hbm [shape: f32[2,16,4,128], index: 2, kind: output, shape index: {}]
  %s3 = sld [smem:[#allocation0]]
  $region41: #{tpu_custom_call.1} parent=0
    _
  %s5 = ssub.s32 1, %s3
  %s6 = scalar_select 0, %s5, %s3
  %8 = dma.hbm_to_smem %s0, 16, [#allocation3], [#allocation2]
  %9 = dma.done [#allocation2], 16
  %10 = sfence
  $region1: #{tpu_custom_call.1} parent=0
    #allocation4 [shape = 'u8[4096]{0}', space=vmem, size = 0x1000, scoped, tag = 'input window, operand 1']
    #allocation5 [shape = 's32[2]{0}', space=sflag, size = 0x8, scoped, tag = 'scoped memory for tpu_custom_call.1']
    #allocation6 [shape = 's32[2]{0}', space=sflag, size = 0x8, scoped, tag = 'scoped memory for tpu_custom_call.1']
    #allocation7 [shape = 'u8[4096]{0}', space=vmem, size = 0x1000, scoped, tag = 'output window, operand 0']
    %11 = vsyncpa [#allocation5], 0
    %s12 = scalar_lea.sflag [#allocation5], 1
    %13 = vsyncpa %s12, 0
    %14 = vsyncpa [#allocation6], 0
    %s15 = scalar_lea.sflag [#allocation6], 1
    %16 = vsyncpa %s15, 0
    loop: start=0, step=1, limit=34
    $region2: #{tpu_custom_call.1} parent=1 // loop_pre_header
      _
    $region3: #{tpu_custom_call.1} parent=1 // loop_header
      %s18 = sphi 0, %s22
      %p19 = scmp.ge.s32.totalorder %s18, 34
      %s25 = sphi 0, %s37
      %s26 = sphi 0, %s33
      %s27 = sphi 0, %s25
      %s28 = sphi 0, %s26
      %s29 = sphi 0, %s27
      %s30 = sphi 0, %s28
      %s44 = sphi 0, %s46
      %s47 = sphi 0, %s44
      %s48 = sphi 0, %s47
      %s64 = sphi 0, %s48
      %s72 = sphi 0, %s74
      %s75 = sphi 0, %s72
      %s76 = sphi 0, %s75
      %s92 = sphi 0, %s76
    $region4: #{tpu_custom_call.1} parent=1 // loop_header_branch
      %21 = sbr.rel (%p19) target = $region8
    $region5: #{tpu_custom_call.1} parent=1 // loop_body
      %s23 = ssub.s32 %s18, 1
      %s24 = ssub.s32 %s18, 2
      %s31 = sadd.s32 1, %s26
      %p32 = scmp.ge.s32.totalorder %s31, 16
      %s33 = scalar_select %p32, 0, %s31
      %s34 = sadd.s32 1, %s25
      %s35 = scalar_select %p32, %s34, %s25
      %p36 = scmp.ge.s32.totalorder %s35, 2
      %s37 = scalar_select %p36, 0, %s35
      %s38 = sld [smem:[#allocation3 + %s26]]
      %s39 = sld [smem:[#allocation3 + %s33]]
      %s40 = ssub.s32 %s25, %s37
      %s41 = ssub.s32 %s38, %s39
      %s42 = sor.u32 %s40, %s41
      %p43 = scmp.eq.s32.totalorder %s42, 0
      %s45 = sadd.s32 %s44, 1
      %s46 = scalar_select %p43, %s44, %s45
      %p49 = pneg %p43
      %p50 = scmp.eq.s32.totalorder %s18, 31
      %p51 = por %p49, %p50
      %p52 = scmp.ne.s32.totalorder %s44, %s47
      %p53 = scmp.eq.s32.totalorder %s18, 0
      %p54 = por %p52, %p53
      %p55 = scmp.ne.s32.totalorder %s44, %s47
      %p56 = scmp.eq.s32.totalorder %s23, 31
      %p57 = por %p55, %p56
      %p58 = scmp.ne.s32.totalorder %s47, %s48
      %p59 = scmp.eq.s32.totalorder %s23, 0
      %p60 = por %p58, %p59
      %p61 = scmp.ne.s32.totalorder %s47, %s48
      %p62 = scmp.eq.s32.totalorder %s24, 31
      %p63 = por %p61, %p62
      %p65 = scmp.ne.s32.totalorder %s48, %s64
      %p66 = scmp.eq.s32.totalorder %s24, 0
      %p67 = por %p65, %p66
      %s68 = ssub.s32 %s25, %s37
      %s69 = ssub.s32 %s26, %s33
      %s70 = sor.u32 %s68, %s69
      %p71 = scmp.eq.s32.totalorder %s70, 0
      %s73 = sadd.s32 %s72, 1
      %s74 = scalar_select %p71, %s72, %s73
      %p77 = pneg %p71
      %p78 = scmp.eq.s32.totalorder %s18, 31
      %p79 = por %p77, %p78
      %p80 = scmp.ne.s32.totalorder %s72, %s75
      %p81 = scmp.eq.s32.totalorder %s18, 0
      %p82 = por %p80, %p81
      %p83 = scmp.ne.s32.totalorder %s72, %s75
      %p84 = scmp.eq.s32.totalorder %s23, 31
      %p85 = por %p83, %p84
      %p86 = scmp.ne.s32.totalorder %s75, %s76
      %p87 = scmp.eq.s32.totalorder %s23, 0
      %p88 = por %p86, %p87
      %p89 = scmp.ne.s32.totalorder %s75, %s76
      %p90 = scmp.eq.s32.totalorder %s24, 31
      %p91 = por %p89, %p90
      %p93 = scmp.ne.s32.totalorder %s76, %s92
      %p94 = scmp.eq.s32.totalorder %s24, 0
      %p95 = por %p93, %p94
      %p96 = scmp.le.s32.totalorder 1, %s18
      %p97 = scmp.lt.s32.totalorder %s18, 33
      %p98 = pnand %p96, %p97
      %p99 = pneg %p98
      // Predicated region
      $region9: #{tpu_custom_call.1} parent=5 // pred_check
        _
      $region10: #{tpu_custom_call.1} parent=5 // pred_check_branch
        %101 = sbr.rel (%p98) target = $region12
      $region11: #{tpu_custom_call.1} parent=5 // pred_region
        %s102 = ssub.s32 %s18, 1
      $region12: #{tpu_custom_call.1} parent=5 // pred_fallthru
        _
      %p103 = scmp.lt.s32.totalorder %s18, 32
      // Predicated region
      $region13: #{tpu_custom_call.1} parent=5 // pred_check
        %p104 = pneg %p103
      $region14: #{tpu_custom_call.1} parent=5 // pred_check_branch
        %106 = sbr.rel (%p104) target = $region16
      $region15: #{tpu_custom_call.1} parent=5 // pred_region
        // Predicated region
        $region17: #{tpu_custom_call.1} parent=15 // pred_check
          %p107 = pneg %p54
        $region18: #{tpu_custom_call.1} parent=15 // pred_check_branch
          %109 = sbr.rel (%p107) target = $region20
        $region19: #{tpu_custom_call.1} parent=15 // pred_region
          %s110 = sand.u32 %s44, 1
          %s111 = scalar_lea.sflag [#allocation5], %s110
          %s112 = sand.u32 %s44, 1
          %s113 = smul.addr %s112, 4
          %s114 = scalar_lea.vmem [#allocation4], %s113
          %s115 = sld [smem:[#allocation3 + %s26]]
          %s117 = ssub.s32 64, 64
          %118 = vsyncadd %s111, %s117
          %s119 = smul.addr %s25, 16
          %s120 = sadd.s32 %s115, %s119
          %s121 = smul.addr %s120, 64
          %s122 = scalar_lea.hbm %s1, %s121
          %s124 = sshll.u32 %s114, 4
          %s125 = int_to_ptr.vmem [resolvable:$true] %s124
          %127 = dma.hbm_to_vmem [thread:$0]  %s122, 64, %s125, %s111
        $region20: #{tpu_custom_call.1} parent=15 // pred_fallthru
          _
      $region16: #{tpu_custom_call.1} parent=5 // pred_fallthru
        _
      %p128 = scmp.le.s32.totalorder 1, %s18
      %p129 = scmp.lt.s32.totalorder %s18, 33
      %p130 = pnand %p128, %p129
      %p131 = pneg %p130
      // Predicated region
      $region21: #{tpu_custom_call.1} parent=5 // pred_check
        _
      $region22: #{tpu_custom_call.1} parent=5 // pred_check_branch
        %133 = sbr.rel (%p130) target = $region24
      $region23: #{tpu_custom_call.1} parent=5 // pred_region
        %s134 = ssub.s32 %s18, 1
        %s135 = sand.u32 %s47, 1
        %s136 = scalar_lea.sflag [#allocation5], %s135
        %s137 = sand.u32 %s47, 1
        %s138 = smul.addr %s137, 4
        %s139 = scalar_lea.vmem [#allocation4], %s138
        // Predicated region
        $region25: #{tpu_custom_call.1} parent=23 // pred_check
          %p140 = pneg %p60
        $region26: #{tpu_custom_call.1} parent=23 // pred_check_branch
          %142 = sbr.rel (%p140) target = $region28
        $region27: #{tpu_custom_call.1} parent=23 // pred_region
          %143 = dma.done %s136, 64
        $region28: #{tpu_custom_call.1} parent=23 // pred_fallthru
          _
        %s144 = sand.u32 %s47, 1
        %s145 = scalar_lea.sflag [#allocation5], %s144
        %s146 = sand.u32 %s47, 1
        %s147 = smul.addr %s146, 4
        %s148 = scalar_lea.vmem [#allocation4], %s147
        %p149 = pneg %p60
        %p150 = pneg %p57
        %p151 = pneg %p88
        %p152 = pneg %p85
        %s153 = sand.u32 %s75, 1
        %s154 = scalar_lea.sflag [#allocation6], %s153
        %s155 = sand.u32 %s75, 1
        %s156 = smul.addr %s155, 4
        %s157 = scalar_lea.vmem [#allocation7], %s156
        %s158 = sld [smem:[#allocation3 + %s28]]
        %v159 = vld [vmem:[%s139] sm:$0xf]
        %160 = vst [vmem:[%s157] sm:$0xf] %v159
        %s161 = sand.u32 %s75, 1
        %s162 = scalar_lea.sflag [#allocation6], %s161
        %s163 = sand.u32 %s75, 1
        %s164 = smul.addr %s163, 4
        %s165 = scalar_lea.vmem [#allocation7], %s164
        // Predicated region
        $region29: #{tpu_custom_call.1} parent=23 // pred_check
          %p166 = pneg %p85
        $region30: #{tpu_custom_call.1} parent=23 // pred_check_branch
          %168 = sbr.rel (%p166) target = $region32
        $region31: #{tpu_custom_call.1} parent=23 // pred_region
          %s170 = ssub.s32 64, 64
          %171 = vsyncadd %s162, %s170
          %s172 = smul.addr %s27, 16
          %s173 = sadd.s32 %s28, %s172
          %s174 = smul.addr %s173, 64
          %s175 = scalar_lea.hbm %s2, %s174
          %s177 = sshll.u32 %s165, 4
          %s178 = int_to_ptr.vmem [resolvable:$true] %s177
          %180 = dma.vmem_to_hbm [thread:$0]  %s178, 64, %s175, %s162
        $region32: #{tpu_custom_call.1} parent=23 // pred_fallthru
          _
      $region24: #{tpu_custom_call.1} parent=5 // pred_fallthru
        _
      %p181 = scmp.le.s32.totalorder 2, %s18
      // Predicated region
      $region33: #{tpu_custom_call.1} parent=5 // pred_check
        %p182 = pneg %p181
      $region34: #{tpu_custom_call.1} parent=5 // pred_check_branch
        %184 = sbr.rel (%p182) target = $region36
      $region35: #{tpu_custom_call.1} parent=5 // pred_region
        %s185 = ssub.s32 %s18, 2
        // Predicated region
        $region37: #{tpu_custom_call.1} parent=35 // pred_check
          %p186 = pneg %p91
        $region38: #{tpu_custom_call.1} parent=35 // pred_check_branch
          %188 = sbr.rel (%p186) target = $region40
        $region39: #{tpu_custom_call.1} parent=35 // pred_region
          %s189 = sand.u32 %s76, 1
          %s190 = scalar_lea.sflag [#allocation6], %s189
          %s191 = sand.u32 %s76, 1
          %s192 = smul.addr %s191, 4
          %s193 = scalar_lea.vmem [#allocation7], %s192
          %194 = dma.done %s190, 64
        $region40: #{tpu_custom_call.1} parent=35 // pred_fallthru
          _
      $region36: #{tpu_custom_call.1} parent=5 // pred_fallthru
        _
    $region6: #{tpu_custom_call.1} parent=1 // loop_footer
      %s22 = sadd.s32 1, %s18
    $region7: #{tpu_custom_call.1} parent=1 // loop_footer_branch
      %17 = sbr.rel target = $region3
    $region8: #{tpu_custom_call.1} parent=1 // loop_exit
      _
    %195 = vsyncpa [#allocation5], 1
    %s196 = scalar_lea.sflag [#allocation5], 1
    %197 = vsyncpa %s196, 1
    %198 = vsyncpa [#allocation6], 1
    %s199 = scalar_lea.sflag [#allocation6], 1
    %200 = vsyncpa %s199, 1

</llo_original>
